<compile_context>
chip_gen: v7x
topology: tpu7x:2x2x1
jax: 0.10.0
libtpu: 0.0.40
codegen_flags: <defaults>
</compile_context>

<pallas_src>
import jax
import jax.numpy as jnp
from jax.experimental import pallas as pl
from jax.experimental.pallas import tpu as pltpu


def _linear_hardsigmoid_kernel(xt_ref, w_ref, b_ref, o_ref):
    """clamp(W @ x_tile + b + 3, 0, 6) / 6 for one lane-tile of the batch.

    xt_ref: (IN, TB)   x in lane-dense layout (batch on the lane axis)
    w_ref : (OUT, IN)  weight (resident, constant index map)
    b_ref : (OUT, 1)   bias as a column (resident)
    o_ref : (OUT, TB)  lane-dense output slab
    """
    xt = xt_ref[...].astype(jnp.float32)          # (IN, TB)
    w = w_ref[...].astype(jnp.float32)            # (OUT, IN)
    b = b_ref[...].astype(jnp.float32)            # (OUT, 1)

    in_features = xt.shape[0]
    out_features = w.shape[0]
    tb = xt.shape[1]

    # K = 3: three VPU FMAs beat an MXU push/pop at <1% utilization.
    acc = jnp.broadcast_to(b, (out_features, tb))
    for k in range(in_features):                  # static unroll
        acc = acc + w[:, k:k + 1] * xt[k:k + 1, :]

    # hardsigmoid-style: (clamp(acc + 3, 0, 6)) / 6
    o_ref[...] = (jnp.clip(acc + 3.0, 0.0, 6.0) / 6.0).astype(o_ref.dtype)


def _pick_tile(batch, *, max_tile=131072, min_tile=512, min_grid=8,
               small_batch=1024):
    """Pick a lane-tile size for the batch axis.

    - batch <= small_batch: one full-extent block (exempt from the 128 rule).
    - otherwise: ~batch/min_grid lanes (so v7x's 2 TensorCores get >= 4 tiles
      each), rounded up to a multiple of 128, capped so the double-buffered
      footprint (~88 B/lane) stays far under the 32 MiB scoped-VMEM default.
    """
    if batch <= small_batch:
        return batch
    tb = max(min_tile, min(max_tile, batch // min_grid))
    tb = ((tb + 127) // 128) * 128
    return min(tb, max_tile)


def linear_hardsigmoid_lane_dense(x_t, weight, bias, *, block_b=None,
                                  out_dtype=None):
    """Primary (lane-dense) entry point.

    x_t   : (IN, B)   activations with batch on the lane axis
    weight: (OUT, IN)
    bias  : (OUT,)
    returns (OUT, B) -- keep this layout for downstream consumers to avoid a
    re-layout pass over the output.
    """
    in_features, batch = x_t.shape
    out_features = weight.shape[0]
    out_dtype = x_t.dtype if out_dtype is None else out_dtype

    w = weight.astype(jnp.float32)                          # (OUT, IN)
    b_col = bias.reshape(out_features, 1).astype(jnp.float32)

    tb = _pick_tile(batch) if block_b is None else block_b
    grid = (pl.cdiv(batch, tb),)                            # ragged last block OK

    return pl.pallas_call(
        _linear_hardsigmoid_kernel,
        out_shape=jax.ShapeDtypeStruct((out_features, batch), out_dtype),
        grid=grid,
        in_specs=[
            pl.BlockSpec((in_features, tb), lambda i: (0, i)),   # x tile (pipelined)
            pl.BlockSpec((out_features, in_features), lambda i: (0, 0)),  # W resident
            pl.BlockSpec((out_features, 1), lambda i: (0, 0)),            # b resident
        ],
        out_specs=pl.BlockSpec((out_features, tb), lambda i: (0, i)),
        compiler_params=pltpu.CompilerParams(
            dimension_semantics=("parallel",)),
    )(x_t, w, b_col)


def model_forward(x, weight, bias, *, force_pallas=False,
                  min_batch_for_pallas=4096):
    """PyTorch-layout API matching Model.forward: x (B, IN) -> (B, OUT).

    The two transposes here exist only because the PyTorch API boundary is
    (B, IN)/(B, OUT); prefer linear_hardsigmoid_lane_dense when composing
    layers to keep the lane-dense layout end-to-end.
    """
    if force_pallas or x.shape[0] >= min_batch_for_pallas:
        out_t = linear_hardsigmoid_lane_dense(x.T, weight, bias)
        return out_t.T
    # Tiny batch: a custom kernel is pure launch overhead; let XLA fuse it.
    return jnp.clip(x @ weight.T + bias + 3.0, 0.0, 6.0) / 6.0


if __name__ == "__main__":
    key = jax.random.PRNGKey(0)
    kx, kw, kb, kx2 = jax.random.split(key, 4)

    # nn.Linear(3, 8): weight (8, 3), bias (8,)
    weight = jax.random.normal(kw, (8, 3), dtype=jnp.float32) * 0.1
    bias = jax.random.normal(kb, (8,), dtype=jnp.float32) * 0.1

    def ref(xv):
        return jnp.clip(xv @ weight.T + bias + 3.0, 0.0, 6.0) / 6.0

    # Spec shape (1, 3): force the Pallas path so the kernel is exercised.
    x1 = jax.random.normal(kx, (1, 3), dtype=jnp.float32)
    out1 = model_forward(x1, weight, bias, force_pallas=True)
    jax.block_until_ready(out1)
    assert out1.shape == (1, 8)
    assert jnp.allclose(out1, ref(x1), atol=1e-5), (out1, ref(x1))

    # Modest batch: lane-dense primary API, default tiling (single full block).
    x2 = jax.random.normal(kx2, (1000, 3), dtype=jnp.float32)
    out2_t = linear_hardsigmoid_lane_dense(x2.T, weight, bias)
    jax.block_until_ready(out2_t)
    assert out2_t.shape == (8, 1000)
    assert jnp.allclose(out2_t.T, ref(x2), atol=1e-5)

    # Same batch with a forced small tile: exercises the multi-tile grid and
    # the ragged last block (1000 = 3*256 + 232) with no explicit padding.
    out3_t = linear_hardsigmoid_lane_dense(x2.T, weight, bias, block_b=256)
    jax.block_until_ready(out3_t)
    assert out3_t.shape == (8, 1000)
    assert jnp.allclose(out3_t.T, ref(x2), atol=1e-5)

    # Default dispatch (tiny batch -> fused XLA path) also matches.
    out4 = model_forward(x1, weight, bias)
    jax.block_until_ready(out4)
    assert jnp.allclose(out4, ref(x1), atol=1e-5)

    print("KERNEL_OK")
</pallas_src>

<mosaic_0001>
module attributes {stable_mosaic.version = 11 : i64} {
  func.func @_linear_hardsigmoid_kernel(%arg0: i32, %arg1: memref<3x1xf32, #tpu.memory_space<vmem>>, %arg2: memref<8x3xf32, #tpu.memory_space<vmem>>, %arg3: memref<8x1xf32, #tpu.memory_space<vmem>>, %arg4: memref<8x1xf32, #tpu.memory_space<vmem>>) attributes {dimension_semantics = [#tpu.dimension_semantics<parallel>], iteration_bounds = array<i64: 1>, scalar_prefetch = 0 : i64, scratch_operands = 0 : i64, tpu.core_type = #tpu.core_type<tc>, window_params = [{transform_indices = @transform_0, window_bounds = array<i64: 3, 1>}, {pipeline_mode = #tpu.pipeline_mode<synchronous>, transform_indices = @transform_1, window_bounds = array<i64: 8, 3>}, {pipeline_mode = #tpu.pipeline_mode<synchronous>, transform_indices = @transform_2, window_bounds = array<i64: 8, 1>}, {transform_indices = @transform_3, window_bounds = array<i64: 8, 1>}]} {
    %c0 = arith.constant 0 : index
    %c0_0 = arith.constant 0 : index
    %0 = vector.load %arg1[%c0, %c0_0] : memref<3x1xf32, #tpu.memory_space<vmem>>, vector<3x1xf32>
    %c0_1 = arith.constant 0 : index
    %c0_2 = arith.constant 0 : index
    %1 = vector.load %arg2[%c0_1, %c0_2] : memref<8x3xf32, #tpu.memory_space<vmem>>, vector<8x3xf32>
    %c0_3 = arith.constant 0 : index
    %c0_4 = arith.constant 0 : index
    %2 = vector.load %arg3[%c0_3, %c0_4] : memref<8x1xf32, #tpu.memory_space<vmem>>, vector<8x1xf32>
    %3 = vector.extract_strided_slice %1 {offsets = [0, 0], sizes = [8, 1], strides = [1, 1]} : vector<8x3xf32> to vector<8x1xf32>
    %4 = vector.extract_strided_slice %0 {offsets = [0, 0], sizes = [1, 1], strides = [1, 1]} : vector<3x1xf32> to vector<1x1xf32>
    %5 = vector.broadcast %4 : vector<1x1xf32> to vector<8x1xf32>
    %6 = arith.mulf %3, %5 : vector<8x1xf32>
    %7 = arith.addf %2, %6 : vector<8x1xf32>
    %8 = vector.extract_strided_slice %1 {offsets = [0, 1], sizes = [8, 1], strides = [1, 1]} : vector<8x3xf32> to vector<8x1xf32>
    %9 = vector.extract_strided_slice %0 {offsets = [1, 0], sizes = [1, 1], strides = [1, 1]} : vector<3x1xf32> to vector<1x1xf32>
    %10 = vector.broadcast %9 : vector<1x1xf32> to vector<8x1xf32>
    %11 = arith.mulf %8, %10 : vector<8x1xf32>
    %12 = arith.addf %7, %11 : vector<8x1xf32>
    %13 = vector.extract_strided_slice %1 {offsets = [0, 2], sizes = [8, 1], strides = [1, 1]} : vector<8x3xf32> to vector<8x1xf32>
    %14 = vector.extract_strided_slice %0 {offsets = [2, 0], sizes = [1, 1], strides = [1, 1]} : vector<3x1xf32> to vector<1x1xf32>
    %15 = vector.broadcast %14 : vector<1x1xf32> to vector<8x1xf32>
    %16 = arith.mulf %13, %15 : vector<8x1xf32>
    %17 = arith.addf %12, %16 : vector<8x1xf32>
    %cst = arith.constant 3.000000e+00 : f32
    %18 = vector.broadcast %cst : f32 to vector<8x1xf32>
    %19 = arith.addf %17, %18 : vector<8x1xf32>
    %cst_5 = arith.constant 0.000000e+00 : f32
    %cst_6 = arith.constant 6.000000e+00 : f32
    %20 = vector.broadcast %cst_5 : f32 to vector<8x1xf32>
    %21 = arith.maximumf %20, %19 : vector<8x1xf32>
    %22 = vector.broadcast %cst_6 : f32 to vector<8x1xf32>
    %23 = arith.minimumf %22, %21 : vector<8x1xf32>
    %cst_7 = arith.constant 6.000000e+00 : f32
    %24 = vector.broadcast %cst_7 : f32 to vector<8x1xf32>
    %25 = arith.divf %23, %24 : vector<8x1xf32>
    %c0_8 = arith.constant 0 : index
    %c0_9 = arith.constant 0 : index
    %26 = vector.load %arg4[%c0_8, %c0_9] : memref<8x1xf32, #tpu.memory_space<vmem>>, vector<8x1xf32>
    tpu.vector_store %arg4[%c0_8, %c0_9], %25 {strides = array<i32>} : memref<8x1xf32, #tpu.memory_space<vmem>>, vector<8x1xf32>,
    return
  }
  func.func @transform_0(%arg0: i32) -> (i32, i32) {
    %c0_i32 = arith.constant 0 : i32
    %c0_i32_0 = arith.constant 0 : i32
    return %c0_i32, %arg0 : i32, i32
  }
  func.func @transform_1(%arg0: i32) -> (i32, i32) {
    %c0_i32 = arith.constant 0 : i32
    %c0_i32_0 = arith.constant 0 : i32
    %c0_i32_1 = arith.constant 0 : i32
    return %c0_i32, %c0_i32_0 : i32, i32
  }
  func.func @transform_2(%arg0: i32) -> (i32, i32) {
    %c0_i32 = arith.constant 0 : i32
    %c0_i32_0 = arith.constant 0 : i32
    %c0_i32_1 = arith.constant 0 : i32
    return %c0_i32, %c0_i32_0 : i32, i32
  }
  func.func @transform_3(%arg0: i32) -> (i32, i32) {
    %c0_i32 = arith.constant 0 : i32
    %c0_i32_0 = arith.constant 0 : i32
    return %c0_i32, %arg0 : i32, i32
  }
}

</mosaic_0001>

<llo_original>
// kernel: tpu_custom_call.1
$region0: #{tpu_custom_call.1}
  #allocation0 [shape = 'u32[]', space=smem, size = 0x4, offset = 0x4, fixed_abs, tag = 'smem constant byte address 0x4 - core index']
  #allocation1 [shape = 'u32[144,128]{1,0:T(1,128)}', space=vmem, size = 0x12000, scoped, tag = 'internal scratch']
  %s0 = inlined_call_operand.vmem [shape: f32[3,1], index: 0, kind: input, shape index: {}]
  %s1 = inlined_call_operand.vmem [shape: f32[8,3], index: 1, kind: input, shape index: {}]
  %s2 = inlined_call_operand.vmem [shape: f32[8,1], index: 2, kind: input, shape index: {}]
  %s3 = inlined_call_operand.vmem [shape: f32[8,1], index: 3, kind: output, shape index: {}]
  %s4 = sld [smem:[#allocation0]]
  $region22: #{tpu_custom_call.1} parent=0
    _
  %s6 = ssub.s32 1, %s4
  %s7 = scalar_select 0, %s6, %s4
  // Predicated region
  $region2: #{tpu_custom_call.1} parent=0 // pred_check
    _
  $region3: #{tpu_custom_call.1} parent=0 // pred_check_branch
    %9 = sbr.rel (0) target = $region5
  $region4: #{tpu_custom_call.1} parent=0 // pred_region
    _
  $region5: #{tpu_custom_call.1} parent=0 // pred_fallthru
    _
  // Predicated region
  $region6: #{tpu_custom_call.1} parent=0 // pred_check
    _
  $region7: #{tpu_custom_call.1} parent=0 // pred_check_branch
    %11 = sbr.rel (0) target = $region9
  $region8: #{tpu_custom_call.1} parent=0 // pred_region
    _
  $region9: #{tpu_custom_call.1} parent=0 // pred_fallthru
    _
  // Predicated region
  $region10: #{tpu_custom_call.1} parent=0 // pred_check
    _
  $region11: #{tpu_custom_call.1} parent=0 // pred_check_branch
    %13 = sbr.rel (0) target = $region13
  $region12: #{tpu_custom_call.1} parent=0 // pred_region
    _
  $region13: #{tpu_custom_call.1} parent=0 // pred_fallthru
    _
  %v14 = vld [vmem:[%s0] sm:$0x7]
  %v15 = vld [vmem:[%s1] sm:$0xff]
  %v16 = vld [vmem:[%s2] sm:$0xff]
  %v17 = vlaneseq
  %v18 = vshrl.u32 %v17, 7
  %v19 = vsub.s32 0, %v18
  %v20 = vrot.slane %v14, %v19
  %v21 = vmul.f32 %v15, %v20
  %v22 = vadd.f32 %v16, %v21
  %v23 = vlaneseq
  %v24 = vshrl.u32 %v23, 7
  %v25 = vsub.s32 1, %v24
  %v26 = vrot.slane %v14, %v25
  %28 = vrot.lane.b32.xlu0 %v26, 1
  %v29 = vpop.permute.xlu0 %28
  %v31 = vmul.f32 %v15, %v29
  %33 = vrot.lane.b32.xlu0 %v31, 127
  %v34 = vpop.permute.xlu0 %33
  %v36 = vadd.f32 %v22, %v34
  %v37 = vlaneseq
  %v38 = vshrl.u32 %v37, 7
  %v39 = vsub.s32 2, %v38
  %v40 = vrot.slane %v14, %v39
  %42 = vrot.lane.b32.xlu0 %v40, 2
  %v43 = vpop.permute.xlu0 %42
  %v45 = vmul.f32 %v15, %v43
  %47 = vrot.lane.b32.xlu0 %v45, 126
  %v48 = vpop.permute.xlu0 %47
  %v50 = vadd.f32 %v36, %v48
  %v51 = vadd.f32 %v50, 3.0
  %v52 = vmax.f32 %v51, 0.0
  %v53 = vmin.f32 %v52, 6.0
  %v54 = vrcp.pop 6.0
  %v55 = vmul.f32 %v53, %v54
  %vm56 = vcmask 7168
  %57 = vst.msk [vmem:[%s3] sm:$0xff] %vm56, %v55
  // Predicated region
  $region14: #{tpu_custom_call.1} parent=0 // pred_check
    _
  $region15: #{tpu_custom_call.1} parent=0 // pred_check_branch
    %59 = sbr.rel (0) target = $region17
  $region16: #{tpu_custom_call.1} parent=0 // pred_region
    _
  $region17: #{tpu_custom_call.1} parent=0 // pred_fallthru
    _
  // Predicated region
  $region18: #{tpu_custom_call.1} parent=0 // pred_check
    _
  $region19: #{tpu_custom_call.1} parent=0 // pred_check_branch
    %61 = sbr.rel (0) target = $region21
  $region20: #{tpu_custom_call.1} parent=0 // pred_region
    _
  $region21: #{tpu_custom_call.1} parent=0 // pred_fallthru
    _

</llo_original>
